<compile_context>
chip_gen: v6e
topology: v6e:2x2x1
jax: 0.10.0
libtpu: 0.0.40
codegen_flags: <defaults>
</compile_context>

<pallas_src>
from functools import partial

import jax
import jax.numpy as jnp
from jax import lax
from jax.experimental import pallas as pl
from jax.experimental.pallas import tpu as pltpu

TEMPERATURE = 0.1
_NEG_BIG = -1e30  # finite "minus infinity": exp() underflows to 0, and
                  # pos * logits (0 * -1e30) stays 0 instead of NaN.  Do NOT
                  # replace with -inf.


def _round_up(x, m):
    return (x + m - 1) // m * m


# ----------------------------- Pallas kernel --------------------------------
def _mpc_loss_kernel(qf_ref, kf_ref, labq_ref, labk_ref, out_ref,
                     m_ref, l_ref, cnt_ref, sp_ref,
                     *, batch, tq, tk, needs_pad_mask, resident_k):
    qi = pl.program_id(0)            # query-row tile   ("parallel")
    ki = pl.program_id(1)            # key-column tile  ("arbitrary" reduction)
    nk = pl.num_programs(1)

    @pl.when(ki == 0)
    def _init():
        m_ref[...] = jnp.full(m_ref.shape, _NEG_BIG, jnp.float32)
        l_ref[...] = jnp.zeros(l_ref.shape, jnp.float32)
        cnt_ref[...] = jnp.zeros(cnt_ref.shape, jnp.float32)
        sp_ref[...] = jnp.zeros(sp_ref.shape, jnp.float32)

    # q rows are pre-normalized and pre-scaled by 1/temperature in the wrapper;
    # k rows are pre-normalized.  No per-step normalization / cast / scale here.
    q = qf_ref[...]                                               # [tq, D]
    if resident_k:
        ks = pl.multiple_of(ki * tk, tk)
        k = kf_ref[pl.ds(ks, tk), :]                              # slice resident K
    else:
        k = kf_ref[...]                                           # streamed K tile

    # logits tile = q @ k.T (temperature already folded into q), f32 accumulation
    logits = lax.dot_general(q, k, (((1,), (1,)), ((), ())),
                             preferred_element_type=jnp.float32)  # [tq, tk]

    # self-similarity (global diagonal) mask; pad-column mask only when padding exists
    r_iota = lax.broadcasted_iota(jnp.int32, (tq, 1), 0)
    c_iota = lax.broadcasted_iota(jnp.int32, (1, tk), 1)
    invalid = (r_iota + qi * tq) == (c_iota + ki * tk)
    if needs_pad_mask:
        invalid = jnp.logical_or(invalid, (ki * tk + c_iota) >= batch)

    lab_eq = labq_ref[...] == labk_ref[...]                       # [tq, tk]
    pos = jnp.logical_and(lab_eq, jnp.logical_not(invalid)).astype(jnp.float32)
    logits = jnp.where(invalid, _NEG_BIG, logits)

    # --- online log-sum-exp over key tiles ---
    tile_max = jnp.max(logits, axis=-1, keepdims=True)            # [tq, 1]
    m_prev = m_ref[...]
    m_new = jnp.maximum(m_prev, tile_max)
    alpha = jnp.exp(m_prev - m_new)
    l_ref[...] = alpha * l_ref[...] + jnp.sum(jnp.exp(logits - m_new),
                                              axis=-1, keepdims=True)
    m_ref[...] = m_new

    # --- positive-pair accumulators (never form p or log_q) ---
    cnt_ref[...] = cnt_ref[...] + jnp.sum(pos, axis=-1, keepdims=True)
    sp_ref[...] = sp_ref[...] + jnp.sum(pos * logits, axis=-1, keepdims=True)

    @pl.when(ki == nk - 1)
    def _finalize():
        lse = m_ref[...] + jnp.log(l_ref[...])
        cnt = cnt_ref[...]
        has_pos = (cnt > 0.0).astype(jnp.float32)      # rows w/o positives -> 0
        loss_row = has_pos * lse - sp_ref[...] / jnp.maximum(cnt, 1.0)
        if needs_pad_mask:
            valid_row = ((qi * tq + r_iota) < batch).astype(jnp.float32)
            loss_row = loss_row * valid_row
        out_ref[...] = loss_row                        # [tq, 1] per-row loss


def multipos_con_loss(feats, labels, temperature=0.1, block_size=512,
                      use_bf16_matmul=True,
                      resident_k_budget_bytes=24 * 1024 * 1024):
    """feats: [B, D] sentence embeddings, labels: [B] int. Returns scalar loss."""
    B, D = feats.shape
    inv_temp = 1.0 / float(temperature)

    # --- hoisted prologue: normalize once, fold 1/temperature into q, cast once ---
    f32 = feats.astype(jnp.float32)
    fn = f32 * lax.rsqrt(jnp.maximum(jnp.sum(f32 * f32, axis=-1, keepdims=True),
                                     1e-24))            # == torch clamp(norm,1e-12)
    mx_dtype = jnp.bfloat16 if use_bf16_matmul else jnp.float32
    qn = (fn * inv_temp).astype(mx_dtype)
    kn = fn.astype(mx_dtype)

    # --- tile size: single tile if the batch fits, else lane-aligned block_size ---
    b8 = _round_up(B, 8)
    t = b8 if b8 <= block_size else _round_up(block_size, 128)
    B_pad = _round_up(B, t)
    needs_pad = B_pad != B
    if needs_pad:
        qn = jnp.pad(qn, ((0, B_pad - B), (0, 0)))
        kn = jnp.pad(kn, ((0, B_pad - B), (0, 0)))
        labels = jnp.pad(labels, (0, B_pad - B), constant_values=-1)  # sentinel

    lab_col = labels.reshape(B_pad, 1).astype(jnp.int32)
    lab_row = labels.reshape(1, B_pad).astype(jnp.int32)
    grid = (B_pad // t, B_pad // t)

    # --- keep K resident in VMEM when it fits (budgeted for v7x's 64 MiB/TC) ---
    itemsize = jnp.dtype(mx_dtype).itemsize
    k_resident_bytes = 2 * B_pad * D * itemsize          # allow for double-buffer
    resident_k = k_resident_bytes <= resident_k_budget_bytes
    k_spec = (pl.BlockSpec((B_pad, D), lambda qi, ki: (0, 0)) if resident_k
              else pl.BlockSpec((t, D), lambda qi, ki: (ki, 0)))
    k_vmem = k_resident_bytes if resident_k else 2 * t * D * itemsize

    vmem_need = (2 * t * D * itemsize      # q tiles (double-buffered)
                 + k_vmem                  # K (resident or tiled)
                 + t * t * 4               # f32 logits tile intermediate
                 + 4 * t * 4               # m/l/cnt/sp scratch
                 + 8 * (t + B_pad) * 4     # labels + per-row output (generous)
                 + (4 << 20))              # headroom
    vmem_limit = int(min(max(vmem_need, 32 << 20), 56 << 20))  # stay under v7x 64 MiB/TC

    kernel = partial(_mpc_loss_kernel, batch=B, tq=t, tk=t,
                     needs_pad_mask=needs_pad, resident_k=resident_k)

    per_row = pl.pallas_call(
        kernel,
        out_shape=jax.ShapeDtypeStruct((B_pad, 1), jnp.float32),
        grid_spec=pltpu.PrefetchScalarGridSpec(
            num_scalar_prefetch=0,
            grid=grid,
            in_specs=[
                pl.BlockSpec((t, D), lambda qi, ki: (qi, 0)),   # q rows (pre-scaled)
                k_spec,                                         # key rows
                pl.BlockSpec((t, 1), lambda qi, ki: (qi, 0)),   # labels (column)
                pl.BlockSpec((1, t), lambda qi, ki: (0, ki)),   # labels (row)
            ],
            out_specs=pl.BlockSpec((t, 1), lambda qi, ki: (qi, 0)),
            scratch_shapes=[pltpu.VMEM((t, 1), jnp.float32)] * 4,  # m, l, cnt, sum(p*logit)
        ),
        compiler_params=pltpu.CompilerParams(
            dimension_semantics=("parallel", "arbitrary"),
            vmem_limit_bytes=vmem_limit),
    )(qn, kn, lab_col, lab_row)

    # final (tiny) reduction in plain JAX: mean over the real batch rows
    return jnp.sum(per_row[:B, 0]) * (1.0 / float(B))


# ------------------------ stand-in sentence encoder --------------------------
# TODO(synk): the original `self.model` is an arbitrary external encoder; here it is
# a deterministic mean-pool + linear projection producing 'sentence_embedding'.
def make_model_params(key, hidden_in, embed_dim):
    w = 0.02 * jax.random.normal(key, (hidden_in, embed_dim), jnp.float32)
    return {"w": w}


def model_apply(params, x):
    # x: [B, S, H] token features -> mean pool over S -> linear -> [B, D]
    pooled = jnp.mean(x, axis=1)
    return {"sentence_embedding": pooled @ params["w"]}


# ----------------------------- pure-JAX reference ----------------------------
def reference_loss(feats, labels, temperature=0.1):
    feats = feats.astype(jnp.float32)
    norm = jnp.sqrt(jnp.sum(feats * feats, axis=-1, keepdims=True))
    feats = feats / jnp.maximum(norm, 1e-12)
    B = feats.shape[0]
    logits = (feats @ feats.T) / temperature
    logits_mask = 1.0 - jnp.eye(B, dtype=jnp.float32)
    mask = (labels[:, None] == labels[None, :]).astype(jnp.float32) * logits_mask
    logits = logits - (1.0 - logits_mask) * 1e9
    logits = logits - jnp.max(logits, axis=-1, keepdims=True)
    log_q = logits - jnp.log(jnp.sum(jnp.exp(logits), axis=-1, keepdims=True))
    p = mask / jnp.maximum(jnp.sum(mask, axis=-1, keepdims=True), 1.0)
    return -jnp.mean(jnp.sum(p * log_q, axis=-1))


# ---------------------------------- main -------------------------------------
if __name__ == "__main__":
    key = jax.random.PRNGKey(0)
    k_w, k_v1, k_v2, k_f2, k_l2 = jax.random.split(key, 5)

    # --- tiny end-to-end example matching the module's forward signature ---
    B, S, H, D = 8, 8, 32, 32
    params = make_model_params(k_w, H, D)

    # two "views" of the batch, as the list `sentence_features` in the torch code
    sentence_features = [
        jax.random.normal(k_v1, (B, S, H), jnp.float32),
        jax.random.normal(k_v2, (B, S, H), jnp.float32),
    ]
    labels = jnp.array([0, 0, 1, 1, 2, 2, 3, 3], jnp.int32)

    # forward: reps = [model(sf) for sf in sentence_features]; feats = reps[0][...]
    reps = [model_apply(params, sf) for sf in sentence_features]
    feats = reps[0]["sentence_embedding"]

    ref = reference_loss(feats, labels, TEMPERATURE)

    # exact f32-MXU path: must match the reference tightly
    loss_f32 = jax.block_until_ready(
        multipos_con_loss(feats, labels, TEMPERATURE, use_bf16_matmul=False))
    assert jnp.isfinite(loss_f32), loss_f32
    assert jnp.allclose(loss_f32, ref, atol=1e-4, rtol=1e-4), (float(loss_f32), float(ref))

    # bf16-MXU fast path (default): looser tolerance from the bf16 similarity matmul
    loss_bf16 = jax.block_until_ready(
        multipos_con_loss(feats, labels, TEMPERATURE, use_bf16_matmul=True))
    assert jnp.isfinite(loss_bf16), loss_bf16
    assert jnp.allclose(loss_bf16, ref, atol=5e-2, rtol=5e-2), (float(loss_bf16), float(ref))

    # --- multi-tile / padded grid, exercising both resident-K and streamed-K paths ---
    B2, D2 = 200, 64
    feats2 = jax.random.normal(k_f2, (B2, D2), jnp.float32)
    labels2 = jax.random.randint(k_l2, (B2,), 0, 10, dtype=jnp.int32)
    ref2 = reference_loss(feats2, labels2, TEMPERATURE)

    loss2_res = jax.block_until_ready(                       # VMEM-resident K
        multipos_con_loss(feats2, labels2, TEMPERATURE, block_size=128,
                          use_bf16_matmul=False))
    assert jnp.allclose(loss2_res, ref2, atol=1e-4, rtol=1e-4), (float(loss2_res), float(ref2))

    loss2_str = jax.block_until_ready(                       # streamed K fallback
        multipos_con_loss(feats2, labels2, TEMPERATURE, block_size=128,
                          use_bf16_matmul=False, resident_k_budget_bytes=0))
    assert jnp.allclose(loss2_str, ref2, atol=1e-4, rtol=1e-4), (float(loss2_str), float(ref2))

    print("KERNEL_OK")
</pallas_src>

<mosaic_0001>
module attributes {stable_mosaic.version = 11 : i64} {
  func.func @_mpc_loss_kernel(%arg0: i32, %arg1: i32, %arg2: memref<8x32xf32, #tpu.memory_space<vmem>>, %arg3: memref<8x32xf32, #tpu.memory_space<vmem>>, %arg4: memref<8x1xi32, #tpu.memory_space<vmem>>, %arg5: memref<1x8xi32, #tpu.memory_space<vmem>>, %arg6: memref<8x1xf32, #tpu.memory_space<vmem>>, %arg7: memref<8x1xf32, #tpu.memory_space<vmem>>, %arg8: memref<8x1xf32, #tpu.memory_space<vmem>>, %arg9: memref<8x1xf32, #tpu.memory_space<vmem>>, %arg10: memref<8x1xf32, #tpu.memory_space<vmem>>) attributes {dimension_semantics = [#tpu.dimension_semantics<parallel>, #tpu.dimension_semantics<arbitrary>], iteration_bounds = array<i64: 1, 1>, scalar_prefetch = 0 : i64, scratch_operands = 4 : i64, tpu.core_type = #tpu.core_type<tc>, window_params = [{transform_indices = @transform_0, window_bounds = array<i64: 8, 32>}, {pipeline_mode = #tpu.pipeline_mode<synchronous>, transform_indices = @transform_1, window_bounds = array<i64: 8, 32>}, {transform_indices = @transform_2, window_bounds = array<i64: 8, 1>}, {transform_indices = @transform_3, window_bounds = array<i64: 1, 8>}, {transform_indices = @transform_4, window_bounds = array<i64: 8, 1>}]} {
    %c0_i32 = arith.constant 0 : i32
    %0 = arith.cmpi eq, %arg1, %c0_i32 : i32
    %1 = arith.extui %0 : i1 to i32
    %c0_i32_0 = arith.constant 0 : i32
    %2 = arith.cmpi ne, %1, %c0_i32_0 : i32
    scf.if %2 {
      %cst_33 = arith.constant -1.000000e+30 : f32
      %61 = vector.broadcast %cst_33 : f32 to vector<8x1xf32>
      %c0_34 = arith.constant 0 : index
      %c0_35 = arith.constant 0 : index
      %62 = vector.load %arg7[%c0_34, %c0_35] : memref<8x1xf32, #tpu.memory_space<vmem>>, vector<8x1xf32>
      tpu.vector_store %arg7[%c0_34, %c0_35], %61 {strides = array<i32>} : memref<8x1xf32, #tpu.memory_space<vmem>>, vector<8x1xf32>,
      %cst_36 = arith.constant 0.000000e+00 : f32
      %63 = vector.broadcast %cst_36 : f32 to vector<8x1xf32>
      %c0_37 = arith.constant 0 : index
      %c0_38 = arith.constant 0 : index
      %64 = vector.load %arg8[%c0_37, %c0_38] : memref<8x1xf32, #tpu.memory_space<vmem>>, vector<8x1xf32>
      tpu.vector_store %arg8[%c0_37, %c0_38], %63 {strides = array<i32>} : memref<8x1xf32, #tpu.memory_space<vmem>>, vector<8x1xf32>,
      %cst_39 = arith.constant 0.000000e+00 : f32
      %65 = vector.broadcast %cst_39 : f32 to vector<8x1xf32>
      %c0_40 = arith.constant 0 : index
      %c0_41 = arith.constant 0 : index
      %66 = vector.load %arg9[%c0_40, %c0_41] : memref<8x1xf32, #tpu.memory_space<vmem>>, vector<8x1xf32>
      tpu.vector_store %arg9[%c0_40, %c0_41], %65 {strides = array<i32>} : memref<8x1xf32, #tpu.memory_space<vmem>>, vector<8x1xf32>,
      %cst_42 = arith.constant 0.000000e+00 : f32
      %67 = vector.broadcast %cst_42 : f32 to vector<8x1xf32>
      %c0_43 = arith.constant 0 : index
      %c0_44 = arith.constant 0 : index
      %68 = vector.load %arg10[%c0_43, %c0_44] : memref<8x1xf32, #tpu.memory_space<vmem>>, vector<8x1xf32>
      tpu.vector_store %arg10[%c0_43, %c0_44], %67 {strides = array<i32>} : memref<8x1xf32, #tpu.memory_space<vmem>>, vector<8x1xf32>,
    } else {
    }
    %c0 = arith.constant 0 : index
    %c0_1 = arith.constant 0 : index
    %3 = vector.load %arg2[%c0, %c0_1] : memref<8x32xf32, #tpu.memory_space<vmem>>, vector<8x32xf32>
    %c8_i32 = arith.constant 8 : i32
    %4 = arith.muli %arg1, %c8_i32 : i32
    %5 = tpu.assume_multiple %4, 8 : i32
    %6 = arith.index_cast %5 : i32 to index
    %c0_2 = arith.constant 0 : index
    %7 = vector.load %arg3[%6, %c0_2] : memref<8x32xf32, #tpu.memory_space<vmem>>, vector<8x32xf32>
    %cst = arith.constant dense<0.000000e+00> : vector<8x8xf32>
    %8 = tpu.matmul %3, %7, %cst {dimension_numbers = #tpu.dot_dimension_numbers<[1], [1], [0], [0], [0, 0, 1, 0], [], []>} : vector<8x32xf32>, vector<8x32xf32>, vector<8x8xf32> -> vector<8x8xf32>
    %9 = tpu.iota {dimensions = array<i32: 0>} : vector<8x1xi32>
    %10 = tpu.iota {dimensions = array<i32: 1>} : vector<1x8xi32>
    %c8_i32_3 = arith.constant 8 : i32
    %11 = arith.muli %arg0, %c8_i32_3 : i32
    %12 = vector.broadcast %11 : i32 to vector<8x1xi32>
    %13 = arith.addi %9, %12 : vector<8x1xi32>
    %c8_i32_4 = arith.constant 8 : i32
    %14 = arith.muli %arg1, %c8_i32_4 : i32
    %15 = vector.broadcast %14 : i32 to vector<1x8xi32>
    %16 = arith.addi %10, %15 : vector<1x8xi32>
    %17 = vector.broadcast %13 : vector<8x1xi32> to vector<8x8xi32>
    %18 = vector.broadcast %16 : vector<1x8xi32> to vector<8x8xi32>
    %19 = arith.cmpi eq, %17, %18 : vector<8x8xi32>
    %c0_5 = arith.constant 0 : index
    %c0_6 = arith.constant 0 : index
    %20 = vector.load %arg4[%c0_5, %c0_6] : memref<8x1xi32, #tpu.memory_space<vmem>>, vector<8x1xi32>
    %c0_7 = arith.constant 0 : index
    %c0_8 = arith.constant 0 : index
    %21 = vector.load %arg5[%c0_7, %c0_8] : memref<1x8xi32, #tpu.memory_space<vmem>>, vector<1x8xi32>
    %22 = vector.broadcast %20 : vector<8x1xi32> to vector<8x8xi32>
    %23 = vector.broadcast %21 : vector<1x8xi32> to vector<8x8xi32>
    %24 = arith.cmpi eq, %22, %23 : vector<8x8xi32>
    %cst_9 = arith.constant dense<true> : vector<8x8xi1>
    %25 = arith.xori %19, %cst_9 : vector<8x8xi1>
    %26 = arith.andi %24, %25 : vector<8x8xi1>
    %27 = arith.extui %26 : vector<8x8xi1> to vector<8x8xi32>
    %28 = arith.sitofp %27 : vector<8x8xi32> to vector<8x8xf32>
    %cst_10 = arith.constant -1.000000e+30 : f32
    %29 = vector.broadcast %cst_10 : f32 to vector<8x8xf32>
    %30 = arith.select %19, %29, %8 : vector<8x8xi1>, vector<8x8xf32>
    %cst_11 = arith.constant dense<0xFF800000> : vector<8xf32>
    %31 = vector.multi_reduction <maximumf>, %30, %cst_11 [1] : vector<8x8xf32> to vector<8xf32>
    %32 = vector.shape_cast %31 : vector<8xf32> to vector<8x1xf32>
    %c0_12 = arith.constant 0 : index
    %c0_13 = arith.constant 0 : index
    %33 = vector.load %arg7[%c0_12, %c0_13] : memref<8x1xf32, #tpu.memory_space<vmem>>, vector<8x1xf32>
    %34 = arith.maximumf %33, %32 : vector<8x1xf32>
    %35 = arith.subf %33, %34 : vector<8x1xf32>
    %36 = math.exp %35 : vector<8x1xf32>
    %c0_14 = arith.constant 0 : index
    %c0_15 = arith.constant 0 : index
    %37 = vector.load %arg8[%c0_14, %c0_15] : memref<8x1xf32, #tpu.memory_space<vmem>>, vector<8x1xf32>
    %38 = arith.mulf %36, %37 : vector<8x1xf32>
    %39 = vector.broadcast %34 : vector<8x1xf32> to vector<8x8xf32>
    %40 = arith.subf %30, %39 : vector<8x8xf32>
    %41 = math.exp %40 : vector<8x8xf32>
    %cst_16 = arith.constant dense<0.000000e+00> : vector<8xf32>
    %42 = vector.multi_reduction <add>, %41, %cst_16 [1] : vector<8x8xf32> to vector<8xf32>
    %43 = vector.shape_cast %42 : vector<8xf32> to vector<8x1xf32>
    %44 = arith.addf %38, %43 : vector<8x1xf32>
    %c0_17 = arith.constant 0 : index
    %c0_18 = arith.constant 0 : index
    %45 = vector.load %arg8[%c0_17, %c0_18] : memref<8x1xf32, #tpu.memory_space<vmem>>, vector<8x1xf32>
    tpu.vector_store %arg8[%c0_17, %c0_18], %44 {strides = array<i32>} : memref<8x1xf32, #tpu.memory_space<vmem>>, vector<8x1xf32>,
    %c0_19 = arith.constant 0 : index
    %c0_20 = arith.constant 0 : index
    %46 = vector.load %arg7[%c0_19, %c0_20] : memref<8x1xf32, #tpu.memory_space<vmem>>, vector<8x1xf32>
    tpu.vector_store %arg7[%c0_19, %c0_20], %34 {strides = array<i32>} : memref<8x1xf32, #tpu.memory_space<vmem>>, vector<8x1xf32>,
    %c0_21 = arith.constant 0 : index
    %c0_22 = arith.constant 0 : index
    %47 = vector.load %arg9[%c0_21, %c0_22] : memref<8x1xf32, #tpu.memory_space<vmem>>, vector<8x1xf32>
    %cst_23 = arith.constant dense<0.000000e+00> : vector<8xf32>
    %48 = vector.multi_reduction <add>, %28, %cst_23 [1] : vector<8x8xf32> to vector<8xf32>
    %49 = vector.shape_cast %48 : vector<8xf32> to vector<8x1xf32>
    %50 = arith.addf %47, %49 : vector<8x1xf32>
    %c0_24 = arith.constant 0 : index
    %c0_25 = arith.constant 0 : index
    %51 = vector.load %arg9[%c0_24, %c0_25] : memref<8x1xf32, #tpu.memory_space<vmem>>, vector<8x1xf32>
    tpu.vector_store %arg9[%c0_24, %c0_25], %50 {strides = array<i32>} : memref<8x1xf32, #tpu.memory_space<vmem>>, vector<8x1xf32>,
    %c0_26 = arith.constant 0 : index
    %c0_27 = arith.constant 0 : index
    %52 = vector.load %arg10[%c0_26, %c0_27] : memref<8x1xf32, #tpu.memory_space<vmem>>, vector<8x1xf32>
    %53 = arith.mulf %28, %30 : vector<8x8xf32>
    %cst_28 = arith.constant dense<0.000000e+00> : vector<8xf32>
    %54 = vector.multi_reduction <add>, %53, %cst_28 [1] : vector<8x8xf32> to vector<8xf32>
    %55 = vector.shape_cast %54 : vector<8xf32> to vector<8x1xf32>
    %56 = arith.addf %52, %55 : vector<8x1xf32>
    %c0_29 = arith.constant 0 : index
    %c0_30 = arith.constant 0 : index
    %57 = vector.load %arg10[%c0_29, %c0_30] : memref<8x1xf32, #tpu.memory_space<vmem>>, vector<8x1xf32>
    tpu.vector_store %arg10[%c0_29, %c0_30], %56 {strides = array<i32>} : memref<8x1xf32, #tpu.memory_space<vmem>>, vector<8x1xf32>,
    %c0_i32_31 = arith.constant 0 : i32
    %58 = arith.cmpi eq, %arg1, %c0_i32_31 : i32
    %59 = arith.extui %58 : i1 to i32
    %c0_i32_32 = arith.constant 0 : i32
    %60 = arith.cmpi ne, %59, %c0_i32_32 : i32
    scf.if %60 {
      %c0_33 = arith.constant 0 : index
      %c0_34 = arith.constant 0 : index
      %61 = vector.load %arg7[%c0_33, %c0_34] : memref<8x1xf32, #tpu.memory_space<vmem>>, vector<8x1xf32>
      %c0_35 = arith.constant 0 : index
      %c0_36 = arith.constant 0 : index
      %62 = vector.load %arg8[%c0_35, %c0_36] : memref<8x1xf32, #tpu.memory_space<vmem>>, vector<8x1xf32>
      %63 = math.log %62 : vector<8x1xf32>
      %64 = arith.addf %61, %63 : vector<8x1xf32>
      %c0_37 = arith.constant 0 : index
      %c0_38 = arith.constant 0 : index
      %65 = vector.load %arg9[%c0_37, %c0_38] : memref<8x1xf32, #tpu.memory_space<vmem>>, vector<8x1xf32>
      %cst_39 = arith.constant 0.000000e+00 : f32
      %66 = vector.broadcast %cst_39 : f32 to vector<8x1xf32>
      %67 = arith.cmpf ogt, %65, %66 : vector<8x1xf32>
      %68 = arith.extui %67 : vector<8x1xi1> to vector<8x1xi32>
      %69 = arith.sitofp %68 : vector<8x1xi32> to vector<8x1xf32>
      %70 = arith.mulf %69, %64 : vector<8x1xf32>
      %c0_40 = arith.constant 0 : index
      %c0_41 = arith.constant 0 : index
      %71 = vector.load %arg10[%c0_40, %c0_41] : memref<8x1xf32, #tpu.memory_space<vmem>>, vector<8x1xf32>
      %cst_42 = arith.constant 1.000000e+00 : f32
      %72 = vector.broadcast %cst_42 : f32 to vector<8x1xf32>
      %73 = arith.maximumf %65, %72 : vector<8x1xf32>
      %74 = arith.divf %71, %73 : vector<8x1xf32>
      %75 = arith.subf %70, %74 : vector<8x1xf32>
      %c0_43 = arith.constant 0 : index
      %c0_44 = arith.constant 0 : index
      %76 = vector.load %arg6[%c0_43, %c0_44] : memref<8x1xf32, #tpu.memory_space<vmem>>, vector<8x1xf32>
      tpu.vector_store %arg6[%c0_43, %c0_44], %75 {strides = array<i32>} : memref<8x1xf32, #tpu.memory_space<vmem>>, vector<8x1xf32>,
    } else {
    }
    return
  }
  func.func @transform_0(%arg0: i32, %arg1: i32) -> (i32, i32) {
    %c0_i32 = arith.constant 0 : i32
    %c0_i32_0 = arith.constant 0 : i32
    return %arg0, %c0_i32 : i32, i32
  }
  func.func @transform_1(%arg0: i32, %arg1: i32) -> (i32, i32) {
    %c0_i32 = arith.constant 0 : i32
    %c0_i32_0 = arith.constant 0 : i32
    %c0_i32_1 = arith.constant 0 : i32
    return %c0_i32, %c0_i32_0 : i32, i32
  }
  func.func @transform_2(%arg0: i32, %arg1: i32) -> (i32, i32) {
    %c0_i32 = arith.constant 0 : i32
    %c0_i32_0 = arith.constant 0 : i32
    return %arg0, %c0_i32 : i32, i32
  }
  func.func @transform_3(%arg0: i32, %arg1: i32) -> (i32, i32) {
    %c0_i32 = arith.constant 0 : i32
    %c0_i32_0 = arith.constant 0 : i32
    return %c0_i32, %arg1 : i32, i32
  }
  func.func @transform_4(%arg0: i32, %arg1: i32) -> (i32, i32) {
    %c0_i32 = arith.constant 0 : i32
    %c0_i32_0 = arith.constant 0 : i32
    return %arg0, %c0_i32 : i32, i32
  }
}

</mosaic_0001>

<llo_original>
// kernel: tpu_custom_call.1
$region0: #{tpu_custom_call.1}
  #allocation0 [shape = 'u32[]', space=smem, size = 0x4, offset = 0x4, fixed_abs, tag = 'smem constant byte address 0x4 - core index']
  #allocation1 [shape = 'u32[144,128]{1,0:T(1,128)}', space=vmem, size = 0x12000, scoped, tag = 'internal scratch']
  #allocation2 [shape = 'f32[8,1]{1,0:T(8,128)}', space=vmem, size = 0x1000, scoped, tag = 'scratch operand']
  #allocation3 [shape = 'f32[8,1]{1,0:T(8,128)}', space=vmem, size = 0x1000, scoped, tag = 'scratch operand']
  #allocation4 [shape = 'f32[8,1]{1,0:T(8,128)}', space=vmem, size = 0x1000, scoped, tag = 'scratch operand']
  #allocation5 [shape = 'f32[8,1]{1,0:T(8,128)}', space=vmem, size = 0x1000, scoped, tag = 'scratch operand']
  %s0 = inlined_call_operand.vmem [shape: f32[8,32], index: 0, kind: input, shape index: {}]
  %s1 = inlined_call_operand.hbm [shape: f32[8,32], index: 1, kind: input, shape index: {}]
  %s2 = inlined_call_operand.vmem [shape: s32[8,1], index: 2, kind: input, shape index: {}]
  %s3 = inlined_call_operand.vmem [shape: s32[1,8], index: 3, kind: input, shape index: {}]
  %s4 = inlined_call_operand.vmem [shape: f32[8,1], index: 4, kind: output, shape index: {}]
  %s5 = sld [smem:[#allocation0]]
  $region38: #{tpu_custom_call.1} parent=0
    _
  %s7 = ssub.s32 1, %s5
  %s8 = scalar_select 0, %s7, %s5
  $region1: #{tpu_custom_call.1} parent=0
    #allocation6 [shape = 'u8[4096]{0}', space=vmem, size = 0x1000, scoped, tag = 'input window, operand 1, single buffered']
    #allocation7 [shape = 's32[1]{0}', space=sflag, size = 0x4, scoped, tag = 'scoped memory for tpu_custom_call.1']
    %9 = vsyncpa [#allocation7], 0
    // Predicated region
    $region2: #{tpu_custom_call.1} parent=1 // pred_check
      _
    $region3: #{tpu_custom_call.1} parent=1 // pred_check_branch
      %11 = sbr.rel (0) target = $region5
    $region4: #{tpu_custom_call.1} parent=1 // pred_region
      _
    $region5: #{tpu_custom_call.1} parent=1 // pred_fallthru
      _
    // Predicated region
    $region6: #{tpu_custom_call.1} parent=1 // pred_check
      _
    $region7: #{tpu_custom_call.1} parent=1 // pred_check_branch
      %13 = sbr.rel (0) target = $region9
    $region8: #{tpu_custom_call.1} parent=1 // pred_region
      %s15 = ssub.s32 128, 128
      %16 = vsyncadd [#allocation7], %s15
      %s18 = sshll.u32 [#allocation6], 4
      %s19 = int_to_ptr.vmem [resolvable:$true] %s18
      %21 = dma.hbm_to_vmem [thread:$0]  %s1, 128, %s19, [#allocation7]
    $region9: #{tpu_custom_call.1} parent=1 // pred_fallthru
      _
    // Predicated region
    $region10: #{tpu_custom_call.1} parent=1 // pred_check
      _
    $region11: #{tpu_custom_call.1} parent=1 // pred_check_branch
      %23 = sbr.rel (0) target = $region13
    $region12: #{tpu_custom_call.1} parent=1 // pred_region
      _
    $region13: #{tpu_custom_call.1} parent=1 // pred_fallthru
      _
    // Predicated region
    $region14: #{tpu_custom_call.1} parent=1 // pred_check
      _
    $region15: #{tpu_custom_call.1} parent=1 // pred_check_branch
      %25 = sbr.rel (0) target = $region17
    $region16: #{tpu_custom_call.1} parent=1 // pred_region
      _
    $region17: #{tpu_custom_call.1} parent=1 // pred_fallthru
      _
    // Predicated region
    $region18: #{tpu_custom_call.1} parent=1 // pred_check
      _
    $region19: #{tpu_custom_call.1} parent=1 // pred_check_branch
      %27 = sbr.rel (0) target = $region21
    $region20: #{tpu_custom_call.1} parent=1 // pred_region
      %28 = dma.done [#allocation7], 128
    $region21: #{tpu_custom_call.1} parent=1 // pred_fallthru
      _
    %p29 = scmp.eq.s32.totalorder 0, 0
    // Predicated region
    $region22: #{tpu_custom_call.1} parent=1 // pred_check
      %p30 = pneg %p29
    $region23: #{tpu_custom_call.1} parent=1 // pred_check_branch
      %32 = sbr.rel (%p30) target = $region25
    $region24: #{tpu_custom_call.1} parent=1 // pred_region
      %vm33 = vcmask 7168
      %34 = vst.msk [vmem:[#allocation2] sm:$0xff] %vm33, -1e+30
      %35 = vst.msk [vmem:[#allocation3] sm:$0xff] %vm33, 0.0
      %36 = vst.msk [vmem:[#allocation4] sm:$0xff] %vm33, 0.0
      %37 = vst.msk [vmem:[#allocation5] sm:$0xff] %vm33, 0.0
    $region25: #{tpu_custom_call.1} parent=1 // pred_fallthru
      _
    %v38 = vld [vmem:[%s0] sm:$0xff]
    %s39 = smul.u32 0, 8
    %s40 = scalar_lea.vmem [#allocation6], %s39
    %v41 = vld [vmem:[%s40] sm:$0xff]
    %vm42 = vcmask 261120
    %v44 = vsel %vm42, %v38, 0
    %v47 = vsel %vm42, %v41, 0
    %49 = vmatprep.subr.mxu0 0.0
    %50 = vmatpush1.xpose.msra.mxu0 0.0
    %51 = vmatprep.subr.mxu0 0.0
    %52 = vmatpush1.xpose.msra.mxu0 0.0
    %53 = vmatprep.subr.mxu0 0.0
    %54 = vmatpush1.xpose.msra.mxu0 0.0
    %55 = vmatprep.subr.mxu0 0.0
    %56 = vmatpush1.xpose.msra.mxu0 0.0
    %57 = vmatprep.subr.mxu0 0.0
    %58 = vmatpush1.xpose.msra.mxu0 0.0
    %59 = vmatprep.subr.mxu0 0.0
    %60 = vmatpush1.xpose.msra.mxu0 0.0
    %61 = vmatprep.subr.mxu0 0.0
    %62 = vmatpush1.xpose.msra.mxu0 0.0
    %63 = vmatprep.subr.mxu0 0.0
    %64 = vmatpush1.xpose.msra.mxu0 0.0
    %65 = vmatprep.subr.mxu0 0.0
    %66 = vmatpush1.xpose.msra.mxu0 0.0
    %67 = vmatprep.subr.mxu0 0.0
    %68 = vmatpush1.xpose.msra.mxu0 0.0
    %69 = vmatprep.subr.mxu0 0.0
    %70 = vmatpush1.xpose.msra.mxu0 0.0
    %71 = vmatprep.subr.mxu0 0.0
    %72 = vmatpush1.xpose.msra.mxu0 0.0
    %73 = vmatprep.subr.mxu0 0.0
    %74 = vmatpush1.xpose.msra.mxu0 0.0
    %75 = vmatprep.subr.mxu0 0.0
    %76 = vmatpush1.xpose.msra.mxu0 0.0
    %77 = vmatprep.subr.mxu0 0.0
    %78 = vmatpush1.xpose.msra.mxu0 0.0
    %79 = vmatprep.subr.mxu0 0.0
    %80 = vmatpush1.xpose.msra.mxu0 %v47
    %81 = vmatprep.subr.mxu0 0.0
    %82 = vmatpush2.xpose.msra.mxu0 0.0
    %83 = vmatprep.subr.mxu0 0.0
    %84 = vmatpush2.xpose.msra.mxu0 0.0
    %85 = vmatprep.subr.mxu0 0.0
    %86 = vmatpush2.xpose.msra.mxu0 0.0
    %87 = vmatprep.subr.mxu0 0.0
    %88 = vmatpush2.xpose.msra.mxu0 0.0
    %89 = vmatprep.subr.mxu0 0.0
    %90 = vmatpush2.xpose.msra.mxu0 0.0
    %91 = vmatprep.subr.mxu0 0.0
    %92 = vmatpush2.xpose.msra.mxu0 0.0
    %93 = vmatprep.subr.mxu0 0.0
    %94 = vmatpush2.xpose.msra.mxu0 0.0
    %95 = vmatprep.subr.mxu0 0.0
    %96 = vmatpush2.xpose.msra.mxu0 0.0
    %97 = vmatprep.subr.mxu0 0.0
    %98 = vmatpush2.xpose.msra.mxu0 0.0
    %99 = vmatprep.subr.mxu0 0.0
    %100 = vmatpush2.xpose.msra.mxu0 0.0
    %101 = vmatprep.subr.mxu0 0.0
    %102 = vmatpush2.xpose.msra.mxu0 0.0
    %103 = vmatprep.subr.mxu0 0.0
    %104 = vmatpush2.xpose.msra.mxu0 0.0
    %105 = vmatprep.subr.mxu0 0.0
    %106 = vmatpush2.xpose.msra.mxu0 0.0
    %107 = vmatprep.subr.mxu0 0.0
    %108 = vmatpush2.xpose.msra.mxu0 0.0
    %109 = vmatprep.subr.mxu0 0.0
    %110 = vmatpush2.xpose.msra.mxu0 0.0
    %111 = vmatprep.subr.mxu0 0.0
    %112 = vmatpush2.xpose.msra.mxu0 0.0
    %113 = vmatprep.mubr.f32.mxu0 0.0
    %114 = vmatmul.mubr.f32.gmra.mxu0 %v44
    %v115 = vpop.f32.mrf.mxu0
    %v116 = vadd.f32 0.0, %v115
    %v117 = vpop.f32.mrf.mxu0
    %118 = vdwg.mxu0
    %v119 = vlaneseq
    %v120 = vshrl.u32 %v119, 7
    %v121 = vlaneseq
    %v122 = vand.u32 %v121, 127
    %s123 = smul.u32 0, 8
    %v124 = vstv %s123
    %v125 = vadd.s32 %v120, %v124
    %v126 = vstv %s39
    %v127 = vadd.s32 %v122, %v126
    %vm128 = vcmp.eq.s32.totalorder %v125, %v127
    %v129 = vld [vmem:[%s2] sm:$0xff]
    %v130 = vld [vmem:[%s3] sm:$0x1]
    %131 = vset.pattern.permute.xlu0 0
    %132 = vperm.xlu0 %131, %v129
    %v133 = vpop.permute.xlu0 %132
    %v134 = vlaneseq
    %v135 = vshrl.u32 %v134, 7
    %v136 = vsub.s32 0, %v135
    %v137 = vrot.slane %v130, %v136
    %vm138 = vcmp.eq.s32.totalorder %v133, %v137
    %vm139 = vmxor %vm128, 1
    %vm140 = vmand %vm138, %vm139
    %v141 = vsel %vm140, 1, 0
    %v142 = vcvt.s32.f32 %v141
    %v143 = vsel %vm128, -1e+30, %v116
    %vm144 = vcmask 64512
    %v145 = vsel %vm144, %v143, -inf
    %146 = vmax.xlane.f32.xlu0 %v145
    %v147 = vpop.xlane.xlu0 %146
    %v148 = vld [vmem:[#allocation2] sm:$0xff]
    %v149 = vmax.f32 %v148, %v147
    %v150 = vsub.f32 %v148, %v149
    %v151 = vmul.f32 %v150, 1.442695
    %v152 = vpow.pop %v151
    %v153 = vld [vmem:[#allocation3] sm:$0xff]
    %v154 = vmul.f32 %v152, %v153
    %156 = vset.pattern.permute.xlu0 0
    %157 = vperm.xlu0 %156, %v149
    %v158 = vpop.permute.xlu0 %157
    %v160 = vsub.f32 %v143, %v158
    %v161 = vmul.f32 %v160, 1.442695
    %v162 = vpow.pop %v161
    %v163 = vsel %vm144, %v162, 0.0
    %164 = vadd.xlane.f32.xlu0 %v163
    %v165 = vpop.xlane.xlu0 %164
    %v166 = vadd.f32 %v154, %v165
    %vm167 = vcmask 7168
    %168 = vst.msk [vmem:[#allocation3] sm:$0xff] %vm167, %v166
    %169 = vst.msk [vmem:[#allocation2] sm:$0xff] %vm167, %v149
    %v170 = vld [vmem:[#allocation4] sm:$0xff]
    %v171 = vsel %vm144, %v142, 0.0
    %172 = vadd.xlane.f32.xlu0 %v171
    %v173 = vpop.xlane.xlu0 %172
    %v174 = vadd.f32 %v170, %v173
    %175 = vst.msk [vmem:[#allocation4] sm:$0xff] %vm167, %v174
    %v176 = vld [vmem:[#allocation5] sm:$0xff]
    %v177 = vmul.f32 %v142, %v143
    %v178 = vsel %vm144, %v177, 0.0
    %179 = vadd.xlane.f32.xlu0 %v178
    %v180 = vpop.xlane.xlu0 %179
    %v181 = vadd.f32 %v176, %v180
    %182 = vst.msk [vmem:[#allocation5] sm:$0xff] %vm167, %v181
    // Predicated region
    $region26: #{tpu_custom_call.1} parent=1 // pred_check
      %p183 = pneg %p29
    $region27: #{tpu_custom_call.1} parent=1 // pred_check_branch
      %185 = sbr.rel (%p183) target = $region29
    $region28: #{tpu_custom_call.1} parent=1 // pred_region
      %v186 = vld [vmem:[#allocation2] sm:$0xff]
      %v187 = vld [vmem:[#allocation3] sm:$0xff]
      %v188 = vlog2.pop %v187
      %v189 = vmul.f32 %v188, 0.6931472
      %v190 = vadd.f32 %v186, %v189
      %v191 = vld [vmem:[#allocation4] sm:$0xff]
      %vm192 = vcmp.gt.f32.partialorder %v191, 0.0
      %v193 = vsel %vm192, 1, 0
      %v194 = vcvt.s32.f32 %v193
      %v195 = vmul.f32 %v194, %v190
      %v196 = vld [vmem:[#allocation5] sm:$0xff]
      %v197 = vmax.f32 %v191, 1.0
      %v198 = vrcp.pop %v197
      %v199 = vmul.f32 %v196, %v198
      %v200 = vsub.f32 %v195, %v199
      %201 = vst.msk [vmem:[%s4] sm:$0xff] %vm167, %v200
    $region29: #{tpu_custom_call.1} parent=1 // pred_fallthru
      _
    // Predicated region
    $region30: #{tpu_custom_call.1} parent=1 // pred_check
      _
    $region31: #{tpu_custom_call.1} parent=1 // pred_check_branch
      %203 = sbr.rel (0) target = $region33
    $region32: #{tpu_custom_call.1} parent=1 // pred_region
      _
    $region33: #{tpu_custom_call.1} parent=1 // pred_fallthru
      _
    // Predicated region
    $region34: #{tpu_custom_call.1} parent=1 // pred_check
      _
    $region35: #{tpu_custom_call.1} parent=1 // pred_check_branch
      %205 = sbr.rel (0) target = $region37
    $region36: #{tpu_custom_call.1} parent=1 // pred_region
      _
    $region37: #{tpu_custom_call.1} parent=1 // pred_fallthru
      _
    %206 = vsyncpa [#allocation7], 1

</llo_original>
